<compile_context>
chip_gen: v5e
topology: v5e:2x2
jax: 0.10.0
libtpu: 0.0.40
codegen_flags: <defaults>
</compile_context>

<pallas_src>
import jax
import jax.numpy as jnp
from jax.experimental import pallas as pl
from jax.experimental.pallas import tpu as pltpu


def _round_up(x, m):
    return ((x + m - 1) // m) * m


def logistic_kernel(w_ref, b_ref, x_ref, o_ref):
    # w_ref: (3, 4) f32 in SMEM, b_ref: (3,) f32 in SMEM
    # x_ref: (4, TILE_R, 128) f32 in VMEM (batch on sublanes+lanes, dense tiles)
    # o_ref: (3, TILE_R, 128) f32 in VMEM
    f_in = x_ref.shape[0]
    f_out = o_ref.shape[0]

    # Full dense (TILE_R, 128) tiles per input feature.
    xs = [x_ref[c] for c in range(f_in)]

    # Linear layer as 12 unrolled VPU multiply-adds with scalar weights from SMEM.
    logits = []
    for r in range(f_out):
        acc = xs[0] * w_ref[r, 0]
        for c in range(1, f_in):
            acc = acc + xs[c] * w_ref[r, c]
        logits.append(acc + b_ref[r])

    # Numerically stable softmax across the f_out feature tiles (VPU + EUP only;
    # no cross-lane XLU reduction needed since features are separate tiles).
    m = logits[0]
    for r in range(1, f_out):
        m = jnp.maximum(m, logits[r])
    es = [jnp.exp(l - m) for l in logits]
    denom = es[0]
    for r in range(1, f_out):
        denom = denom + es[r]
    inv = 1.0 / denom  # exact reciprocal: rows sum to 1, matches reference

    for r in range(f_out):
        o_ref[r] = es[r] * inv


def logistic_forward(x, weight, bias, *, max_tile_r=512):
    """x: (N, 4) f32, weight: (3, 4) f32, bias: (3,) f32 -> (N, 3) f32."""
    n, f_in = x.shape
    f_out = weight.shape[0]
    lanes = 128

    x = jnp.asarray(x, jnp.float32)
    weight = jnp.asarray(weight, jnp.float32)
    bias = jnp.asarray(bias, jnp.float32)

    # Feature-major layout so the batch occupies the (sublane, lane) axes.
    x_t = x.T  # (4, N)

    # Columns of 128 lanes, rounded up to the 8-sublane granularity (1024 elems).
    r_needed = _round_up(max(1, -(-n // lanes)), 8)

    # Pick the largest tile (multiple-of-8 columns, <= max_tile_r) with small
    # padding waste, preferring grid >= 2 for v7x megacore + DMA overlap.
    tile_r, padded_r = 8, r_needed
    cand = max(8, max_tile_r)
    while cand >= 8:
        p = _round_up(r_needed, cand)
        waste_ok = (p - r_needed) <= max(r_needed // 8, 8)
        grid_ok = (p // cand >= 2) or (cand == 8)
        if waste_ok and grid_ok:
            tile_r, padded_r = cand, p
            break
        cand //= 2

    padded_n = padded_r * lanes
    if padded_n != n:
        x_t = jnp.pad(x_t, ((0, 0), (0, padded_n - n)))

    # Free contiguous reshape to dense (8,128)-tileable 3-D layout.
    x_blk = x_t.reshape(f_in, padded_r, lanes)
    grid = (padded_r // tile_r,)

    out_blk = pl.pallas_call(
        logistic_kernel,
        out_shape=jax.ShapeDtypeStruct((f_out, padded_r, lanes), jnp.float32),
        grid=grid,
        in_specs=[
            pl.BlockSpec(memory_space=pltpu.MemorySpace.SMEM),        # weight (3, 4)
            pl.BlockSpec(memory_space=pltpu.MemorySpace.SMEM),        # bias (3,)
            pl.BlockSpec((f_in, tile_r, lanes), lambda i: (0, i, 0)),  # x tiles
        ],
        out_specs=pl.BlockSpec((f_out, tile_r, lanes), lambda i: (0, i, 0)),
        compiler_params=pltpu.CompilerParams(
            dimension_semantics=("parallel",),
            vmem_limit_bytes=32 * 1024 * 1024,
        ),
    )(weight, bias, x_blk)

    # Back to the PyTorch (N, 3) convention; drop batch padding.
    out_t = out_blk.reshape(f_out, padded_n)
    return out_t[:, :n].T


if __name__ == "__main__":
    key = jax.random.PRNGKey(0)
    kx, kw, kb, kx2 = jax.random.split(key, 4)

    in_features, out_features = 4, 3
    bound = 1.0 / (in_features ** 0.5)
    weight = jax.random.uniform(
        kw, (out_features, in_features), jnp.float32, minval=-bound, maxval=bound
    )
    bias = jax.random.uniform(
        kb, (out_features,), jnp.float32, minval=-bound, maxval=bound
    )

    # Small-shape check (single tile, batch padded to 1024 lanes-worth).
    batch = 8
    x = jax.random.normal(kx, (batch, in_features), jnp.float32)
    out = jax.block_until_ready(logistic_forward(x, weight, bias))
    ref = jax.nn.softmax(x @ weight.T + bias, axis=1)
    assert out.shape == (batch, out_features)
    assert jnp.allclose(out, ref, atol=1e-4, rtol=1e-4), (
        f"max abs err = {float(jnp.max(jnp.abs(out - ref)))}"
    )

    # Multi-tile check (exercises grid >= 2 and the padding/slice path).
    batch2 = 2500
    x2 = jax.random.normal(kx2, (batch2, in_features), jnp.float32)
    out2 = jax.block_until_ready(logistic_forward(x2, weight, bias, max_tile_r=8))
    ref2 = jax.nn.softmax(x2 @ weight.T + bias, axis=1)
    assert out2.shape == (batch2, out_features)
    assert jnp.allclose(out2, ref2, atol=1e-4, rtol=1e-4), (
        f"max abs err = {float(jnp.max(jnp.abs(out2 - ref2)))}"
    )

    print("KERNEL_OK")
</pallas_src>

<mosaic_0001>
module attributes {stable_mosaic.version = 11 : i64} {
  func.func @logistic_kernel(%arg0: i32, %arg1: memref<3x4xf32, #tpu.memory_space<smem>>, %arg2: memref<3xf32, #tpu.memory_space<smem>>, %arg3: memref<4x8x128xf32, #tpu.memory_space<vmem>>, %arg4: memref<3x8x128xf32, #tpu.memory_space<vmem>>) attributes {dimension_semantics = [#tpu.dimension_semantics<parallel>], iteration_bounds = array<i64: 1>, scalar_prefetch = 0 : i64, scratch_operands = 0 : i64, tpu.core_type = #tpu.core_type<tc>, window_params = [{transform_indices = @transform_0, window_bounds = array<i64: 3, 4>}, {transform_indices = @transform_1, window_bounds = array<i64: 3>}, {transform_indices = @transform_2, window_bounds = array<i64: 4, 8, 128>}, {transform_indices = @transform_3, window_bounds = array<i64: 3, 8, 128>}]} {
    %c0 = arith.constant 0 : index
    %c0_0 = arith.constant 0 : index
    %c0_1 = arith.constant 0 : index
    %0 = vector.load %arg3[%c0, %c0_0, %c0_1] : memref<4x8x128xf32, #tpu.memory_space<vmem>>, vector<1x8x128xf32>
    %1 = vector.shape_cast %0 : vector<1x8x128xf32> to vector<8x128xf32>
    %c1 = arith.constant 1 : index
    %c0_2 = arith.constant 0 : index
    %c0_3 = arith.constant 0 : index
    %2 = vector.load %arg3[%c1, %c0_2, %c0_3] : memref<4x8x128xf32, #tpu.memory_space<vmem>>, vector<1x8x128xf32>
    %3 = vector.shape_cast %2 : vector<1x8x128xf32> to vector<8x128xf32>
    %c2 = arith.constant 2 : index
    %c0_4 = arith.constant 0 : index
    %c0_5 = arith.constant 0 : index
    %4 = vector.load %arg3[%c2, %c0_4, %c0_5] : memref<4x8x128xf32, #tpu.memory_space<vmem>>, vector<1x8x128xf32>
    %5 = vector.shape_cast %4 : vector<1x8x128xf32> to vector<8x128xf32>
    %c3 = arith.constant 3 : index
    %c0_6 = arith.constant 0 : index
    %c0_7 = arith.constant 0 : index
    %6 = vector.load %arg3[%c3, %c0_6, %c0_7] : memref<4x8x128xf32, #tpu.memory_space<vmem>>, vector<1x8x128xf32>
    %7 = vector.shape_cast %6 : vector<1x8x128xf32> to vector<8x128xf32>
    %c0_8 = arith.constant 0 : index
    %c0_9 = arith.constant 0 : index
    %8 = memref.load %arg1[%c0_8, %c0_9] : memref<3x4xf32, #tpu.memory_space<smem>>
    %9 = vector.broadcast %8 : f32 to vector<8x128xf32>
    %10 = arith.mulf %1, %9 : vector<8x128xf32>
    %c0_10 = arith.constant 0 : index
    %c1_11 = arith.constant 1 : index
    %11 = memref.load %arg1[%c0_10, %c1_11] : memref<3x4xf32, #tpu.memory_space<smem>>
    %12 = vector.broadcast %11 : f32 to vector<8x128xf32>
    %13 = arith.mulf %3, %12 : vector<8x128xf32>
    %14 = arith.addf %10, %13 : vector<8x128xf32>
    %c0_12 = arith.constant 0 : index
    %c2_13 = arith.constant 2 : index
    %15 = memref.load %arg1[%c0_12, %c2_13] : memref<3x4xf32, #tpu.memory_space<smem>>
    %16 = vector.broadcast %15 : f32 to vector<8x128xf32>
    %17 = arith.mulf %5, %16 : vector<8x128xf32>
    %18 = arith.addf %14, %17 : vector<8x128xf32>
    %c0_14 = arith.constant 0 : index
    %c3_15 = arith.constant 3 : index
    %19 = memref.load %arg1[%c0_14, %c3_15] : memref<3x4xf32, #tpu.memory_space<smem>>
    %20 = vector.broadcast %19 : f32 to vector<8x128xf32>
    %21 = arith.mulf %7, %20 : vector<8x128xf32>
    %22 = arith.addf %18, %21 : vector<8x128xf32>
    %c0_16 = arith.constant 0 : index
    %23 = memref.load %arg2[%c0_16] : memref<3xf32, #tpu.memory_space<smem>>
    %24 = vector.broadcast %23 : f32 to vector<8x128xf32>
    %25 = arith.addf %22, %24 : vector<8x128xf32>
    %c1_17 = arith.constant 1 : index
    %c0_18 = arith.constant 0 : index
    %26 = memref.load %arg1[%c1_17, %c0_18] : memref<3x4xf32, #tpu.memory_space<smem>>
    %27 = vector.broadcast %26 : f32 to vector<8x128xf32>
    %28 = arith.mulf %1, %27 : vector<8x128xf32>
    %c1_19 = arith.constant 1 : index
    %c1_20 = arith.constant 1 : index
    %29 = memref.load %arg1[%c1_19, %c1_20] : memref<3x4xf32, #tpu.memory_space<smem>>
    %30 = vector.broadcast %29 : f32 to vector<8x128xf32>
    %31 = arith.mulf %3, %30 : vector<8x128xf32>
    %32 = arith.addf %28, %31 : vector<8x128xf32>
    %c1_21 = arith.constant 1 : index
    %c2_22 = arith.constant 2 : index
    %33 = memref.load %arg1[%c1_21, %c2_22] : memref<3x4xf32, #tpu.memory_space<smem>>
    %34 = vector.broadcast %33 : f32 to vector<8x128xf32>
    %35 = arith.mulf %5, %34 : vector<8x128xf32>
    %36 = arith.addf %32, %35 : vector<8x128xf32>
    %c1_23 = arith.constant 1 : index
    %c3_24 = arith.constant 3 : index
    %37 = memref.load %arg1[%c1_23, %c3_24] : memref<3x4xf32, #tpu.memory_space<smem>>
    %38 = vector.broadcast %37 : f32 to vector<8x128xf32>
    %39 = arith.mulf %7, %38 : vector<8x128xf32>
    %40 = arith.addf %36, %39 : vector<8x128xf32>
    %c1_25 = arith.constant 1 : index
    %41 = memref.load %arg2[%c1_25] : memref<3xf32, #tpu.memory_space<smem>>
    %42 = vector.broadcast %41 : f32 to vector<8x128xf32>
    %43 = arith.addf %40, %42 : vector<8x128xf32>
    %c2_26 = arith.constant 2 : index
    %c0_27 = arith.constant 0 : index
    %44 = memref.load %arg1[%c2_26, %c0_27] : memref<3x4xf32, #tpu.memory_space<smem>>
    %45 = vector.broadcast %44 : f32 to vector<8x128xf32>
    %46 = arith.mulf %1, %45 : vector<8x128xf32>
    %c2_28 = arith.constant 2 : index
    %c1_29 = arith.constant 1 : index
    %47 = memref.load %arg1[%c2_28, %c1_29] : memref<3x4xf32, #tpu.memory_space<smem>>
    %48 = vector.broadcast %47 : f32 to vector<8x128xf32>
    %49 = arith.mulf %3, %48 : vector<8x128xf32>
    %50 = arith.addf %46, %49 : vector<8x128xf32>
    %c2_30 = arith.constant 2 : index
    %c2_31 = arith.constant 2 : index
    %51 = memref.load %arg1[%c2_30, %c2_31] : memref<3x4xf32, #tpu.memory_space<smem>>
    %52 = vector.broadcast %51 : f32 to vector<8x128xf32>
    %53 = arith.mulf %5, %52 : vector<8x128xf32>
    %54 = arith.addf %50, %53 : vector<8x128xf32>
    %c2_32 = arith.constant 2 : index
    %c3_33 = arith.constant 3 : index
    %55 = memref.load %arg1[%c2_32, %c3_33] : memref<3x4xf32, #tpu.memory_space<smem>>
    %56 = vector.broadcast %55 : f32 to vector<8x128xf32>
    %57 = arith.mulf %7, %56 : vector<8x128xf32>
    %58 = arith.addf %54, %57 : vector<8x128xf32>
    %c2_34 = arith.constant 2 : index
    %59 = memref.load %arg2[%c2_34] : memref<3xf32, #tpu.memory_space<smem>>
    %60 = vector.broadcast %59 : f32 to vector<8x128xf32>
    %61 = arith.addf %58, %60 : vector<8x128xf32>
    %62 = arith.maximumf %25, %43 : vector<8x128xf32>
    %63 = arith.maximumf %62, %61 : vector<8x128xf32>
    %64 = arith.subf %25, %63 : vector<8x128xf32>
    %65 = math.exp %64 : vector<8x128xf32>
    %66 = arith.subf %43, %63 : vector<8x128xf32>
    %67 = math.exp %66 : vector<8x128xf32>
    %68 = arith.subf %61, %63 : vector<8x128xf32>
    %69 = math.exp %68 : vector<8x128xf32>
    %70 = arith.addf %65, %67 : vector<8x128xf32>
    %71 = arith.addf %70, %69 : vector<8x128xf32>
    %cst = arith.constant 1.000000e+00 : f32
    %72 = vector.broadcast %cst : f32 to vector<8x128xf32>
    %73 = arith.divf %72, %71 : vector<8x128xf32>
    %74 = arith.mulf %65, %73 : vector<8x128xf32>
    %c0_35 = arith.constant 0 : index
    %c0_36 = arith.constant 0 : index
    %c0_37 = arith.constant 0 : index
    %75 = vector.load %arg4[%c0_35, %c0_36, %c0_37] : memref<3x8x128xf32, #tpu.memory_space<vmem>>, vector<1x8x128xf32>
    %76 = vector.shape_cast %75 : vector<1x8x128xf32> to vector<8x128xf32>
    %77 = vector.shape_cast %74 : vector<8x128xf32> to vector<1x8x128xf32>
    tpu.vector_store %arg4[%c0_35, %c0_36, %c0_37], %77 {strides = array<i32>} : memref<3x8x128xf32, #tpu.memory_space<vmem>>, vector<1x8x128xf32>,
    %78 = arith.mulf %67, %73 : vector<8x128xf32>
    %c1_38 = arith.constant 1 : index
    %c0_39 = arith.constant 0 : index
    %c0_40 = arith.constant 0 : index
    %79 = vector.load %arg4[%c1_38, %c0_39, %c0_40] : memref<3x8x128xf32, #tpu.memory_space<vmem>>, vector<1x8x128xf32>
    %80 = vector.shape_cast %79 : vector<1x8x128xf32> to vector<8x128xf32>
    %81 = vector.shape_cast %78 : vector<8x128xf32> to vector<1x8x128xf32>
    tpu.vector_store %arg4[%c1_38, %c0_39, %c0_40], %81 {strides = array<i32>} : memref<3x8x128xf32, #tpu.memory_space<vmem>>, vector<1x8x128xf32>,
    %82 = arith.mulf %69, %73 : vector<8x128xf32>
    %c2_41 = arith.constant 2 : index
    %c0_42 = arith.constant 0 : index
    %c0_43 = arith.constant 0 : index
    %83 = vector.load %arg4[%c2_41, %c0_42, %c0_43] : memref<3x8x128xf32, #tpu.memory_space<vmem>>, vector<1x8x128xf32>
    %84 = vector.shape_cast %83 : vector<1x8x128xf32> to vector<8x128xf32>
    %85 = vector.shape_cast %82 : vector<8x128xf32> to vector<1x8x128xf32>
    tpu.vector_store %arg4[%c2_41, %c0_42, %c0_43], %85 {strides = array<i32>} : memref<3x8x128xf32, #tpu.memory_space<vmem>>, vector<1x8x128xf32>,
    return
  }
  func.func @transform_0(%arg0: i32) -> (i32, i32) {
    %c0_i32 = arith.constant 0 : i32
    %c0_i32_0 = arith.constant 0 : i32
    %c0_i32_1 = arith.constant 0 : i32
    return %c0_i32, %c0_i32_0 : i32, i32
  }
  func.func @transform_1(%arg0: i32) -> i32 {
    %c0_i32 = arith.constant 0 : i32
    %c0_i32_0 = arith.constant 0 : i32
    return %c0_i32 : i32
  }
  func.func @transform_2(%arg0: i32) -> (i32, i32, i32) {
    %c0_i32 = arith.constant 0 : i32
    %c0_i32_0 = arith.constant 0 : i32
    %c0_i32_1 = arith.constant 0 : i32
    return %c0_i32, %arg0, %c0_i32_0 : i32, i32, i32
  }
  func.func @transform_3(%arg0: i32) -> (i32, i32, i32) {
    %c0_i32 = arith.constant 0 : i32
    %c0_i32_0 = arith.constant 0 : i32
    %c0_i32_1 = arith.constant 0 : i32
    return %c0_i32, %arg0, %c0_i32_0 : i32, i32, i32
  }
}

</mosaic_0001>

<llo_original>
// kernel: tpu_custom_call.1
$region0: #{tpu_custom_call.1}
  #allocation0 [shape = 'u32[]', space=smem, size = 0x4, offset = 0x4, fixed_abs, tag = 'smem constant byte address 0x4 - core index']
  #allocation1 [shape = 'u32[72,128]{1,0:T(1,128)}', space=vmem, size = 0x9000, scoped, tag = 'internal scratch']
  %s0 = inlined_call_operand.hbm [shape: f32[3,4], index: 0, kind: input, shape index: {}]
  %s1 = inlined_call_operand.hbm [shape: f32[3], index: 1, kind: input, shape index: {}]
  %s2 = inlined_call_operand.hbm [shape: f32[4,8,128], index: 2, kind: input, shape index: {}]
  %s3 = inlined_call_operand.hbm [shape: f32[3,8,128], index: 3, kind: output, shape index: {}]
  %s4 = sld [smem:[#allocation0]]
  $region34: #{tpu_custom_call.1} parent=0
    _
  %s6 = ssub.s32 1, %s4
  %s7 = scalar_select 0, %s6, %s4
  $region1: #{tpu_custom_call.1} parent=0
    #allocation2 [shape = 'u8[2048]{0}', space=smem, size = 0x800, scoped, tag = 'input window, operand 0, single buffered']
    #allocation3 [shape = 's32[1]{0}', space=sflag, size = 0x4, scoped, tag = 'scoped memory for tpu_custom_call.1']
    #allocation4 [shape = 's32[1]{0}', space=sflag, size = 0x4, scoped, tag = 'scoped memory for tpu_custom_call.1']
    #allocation5 [shape = 's32[1]{0}', space=sflag, size = 0x4, scoped, tag = 'scoped memory for tpu_custom_call.1']
    #allocation6 [shape = 'u8[512]{0}', space=smem, size = 0x200, scoped, tag = 'input window, operand 1, single buffered']
    #allocation7 [shape = 's32[1]{0}', space=sflag, size = 0x4, scoped, tag = 'scoped memory for tpu_custom_call.1']
    #allocation8 [shape = 'u8[16384]{0}', space=vmem, size = 0x4000, scoped, tag = 'input window, operand 2, single buffered']
    #allocation9 [shape = 'u8[12288]{0}', space=vmem, size = 0x3000, scoped, tag = 'output window, operand 0, single buffered']
    %8 = vsyncpa [#allocation5], 0
    %9 = vsyncpa [#allocation7], 0
    %10 = vsyncpa [#allocation3], 0
    %11 = vsyncpa [#allocation4], 0
    // Predicated region
    $region2: #{tpu_custom_call.1} parent=1 // pred_check
      _
    $region3: #{tpu_custom_call.1} parent=1 // pred_check_branch
      %13 = sbr.rel (0) target = $region5
    $region4: #{tpu_custom_call.1} parent=1 // pred_region
      %15 = vsyncadd [#allocation5], 0
      %s17 = sshll.u32 %s0, 4
      %s18 = int_to_ptr.hbm [resolvable:$true] %s17
      %20 = dma.hbm_to_smem %s18, 64, [#allocation2], [#allocation5]
    $region5: #{tpu_custom_call.1} parent=1 // pred_fallthru
      _
    // Predicated region
    $region6: #{tpu_custom_call.1} parent=1 // pred_check
      _
    $region7: #{tpu_custom_call.1} parent=1 // pred_check_branch
      %22 = sbr.rel (0) target = $region9
    $region8: #{tpu_custom_call.1} parent=1 // pred_region
      %24 = vsyncadd [#allocation7], 0
      %s26 = sshll.u32 %s1, 4
      %s27 = int_to_ptr.hbm [resolvable:$true] %s26
      %29 = dma.hbm_to_smem %s27, 16, [#allocation6], [#allocation7]
    $region9: #{tpu_custom_call.1} parent=1 // pred_fallthru
      _
    // Predicated region
    $region10: #{tpu_custom_call.1} parent=1 // pred_check
      _
    $region11: #{tpu_custom_call.1} parent=1 // pred_check_branch
      %31 = sbr.rel (0) target = $region13
    $region12: #{tpu_custom_call.1} parent=1 // pred_region
      %33 = vsyncadd [#allocation3], 0
      %s34 = sshll.u32 %s2, 4
      %s35 = int_to_ptr.hbm [resolvable:$true] %s34
      %s36 = sshll.u32 [#allocation8], 4
      %s37 = int_to_ptr.vmem [resolvable:$true] %s36
      %42 = dma.hbm_to_vmem [thread:$0]  %s35, 512, %s37, [#allocation3], 128, 128, 8
    $region13: #{tpu_custom_call.1} parent=1 // pred_fallthru
      _
    // Predicated region
    $region14: #{tpu_custom_call.1} parent=1 // pred_check
      _
    $region15: #{tpu_custom_call.1} parent=1 // pred_check_branch
      %44 = sbr.rel (0) target = $region17
    $region16: #{tpu_custom_call.1} parent=1 // pred_region
      %46 = dma.done [#allocation5], 64
    $region17: #{tpu_custom_call.1} parent=1 // pred_fallthru
      _
    // Predicated region
    $region18: #{tpu_custom_call.1} parent=1 // pred_check
      _
    $region19: #{tpu_custom_call.1} parent=1 // pred_check_branch
      %48 = sbr.rel (0) target = $region21
    $region20: #{tpu_custom_call.1} parent=1 // pred_region
      %50 = dma.done [#allocation7], 16
    $region21: #{tpu_custom_call.1} parent=1 // pred_fallthru
      _
    // Predicated region
    $region22: #{tpu_custom_call.1} parent=1 // pred_check
      _
    $region23: #{tpu_custom_call.1} parent=1 // pred_check_branch
      %52 = sbr.rel (0) target = $region25
    $region24: #{tpu_custom_call.1} parent=1 // pred_region
      %54 = dma.done [#allocation3], 512
    $region25: #{tpu_custom_call.1} parent=1 // pred_fallthru
      _
    %55 = sfence
    %v56 = vld [vmem:[#allocation8] sm:$0xff]
    %s57 = scalar_lea.vmem [#allocation8], 8
    %v58 = vld [vmem:[%s57] sm:$0xff]
    %s59 = scalar_lea.vmem [#allocation8], 16
    %v60 = vld [vmem:[%s59] sm:$0xff]
    %s61 = scalar_lea.vmem [#allocation8], 24
    %v62 = vld [vmem:[%s61] sm:$0xff]
    %s63 = sld [smem:[#allocation2]]
    %v64 = vstv %s63
    %v65 = vmul.f32 %v56, %v64
    %s66 = sld [smem:[#allocation2 + $0x1]]
    %v67 = vstv %s66
    %v68 = vmul.f32 %v58, %v67
    %v69 = vadd.f32 %v65, %v68
    %s70 = sld [smem:[#allocation2 + $0x2]]
    %v71 = vstv %s70
    %v72 = vmul.f32 %v60, %v71
    %v73 = vadd.f32 %v69, %v72
    %s74 = sld [smem:[#allocation2 + $0x3]]
    %v75 = vstv %s74
    %v76 = vmul.f32 %v62, %v75
    %v77 = vadd.f32 %v73, %v76
    %s78 = sld [smem:[#allocation6]]
    %v79 = vstv %s78
    %v80 = vadd.f32 %v77, %v79
    %s81 = sld [smem:[#allocation2 + $0x80]]
    %v82 = vstv %s81
    %v83 = vmul.f32 %v56, %v82
    %s84 = sld [smem:[#allocation2 + $0x81]]
    %v85 = vstv %s84
    %v86 = vmul.f32 %v58, %v85
    %v87 = vadd.f32 %v83, %v86
    %s88 = sld [smem:[#allocation2 + $0x82]]
    %v89 = vstv %s88
    %v90 = vmul.f32 %v60, %v89
    %v91 = vadd.f32 %v87, %v90
    %s92 = sld [smem:[#allocation2 + $0x83]]
    %v93 = vstv %s92
    %v94 = vmul.f32 %v62, %v93
    %v95 = vadd.f32 %v91, %v94
    %s96 = sld [smem:[#allocation6 + $0x1]]
    %v97 = vstv %s96
    %v98 = vadd.f32 %v95, %v97
    %s99 = sld [smem:[#allocation2 + $0x100]]
    %v100 = vstv %s99
    %v101 = vmul.f32 %v56, %v100
    %s102 = sld [smem:[#allocation2 + $0x101]]
    %v103 = vstv %s102
    %v104 = vmul.f32 %v58, %v103
    %v105 = vadd.f32 %v101, %v104
    %s106 = sld [smem:[#allocation2 + $0x102]]
    %v107 = vstv %s106
    %v108 = vmul.f32 %v60, %v107
    %v109 = vadd.f32 %v105, %v108
    %s110 = sld [smem:[#allocation2 + $0x103]]
    %v111 = vstv %s110
    %v112 = vmul.f32 %v62, %v111
    %v113 = vadd.f32 %v109, %v112
    %s114 = sld [smem:[#allocation6 + $0x2]]
    %v115 = vstv %s114
    %v116 = vadd.f32 %v113, %v115
    %v117 = vmax.f32 %v80, %v98
    %v118 = vmax.f32 %v117, %v116
    %v119 = vsub.f32 %v80, %v118
    %v120 = vmul.f32 %v119, 1.442695
    %v121 = vpow.pop %v120
    %v122 = vsub.f32 %v98, %v118
    %v123 = vmul.f32 %v122, 1.442695
    %v124 = vpow.pop %v123
    %v125 = vsub.f32 %v116, %v118
    %v126 = vmul.f32 %v125, 1.442695
    %v127 = vpow.pop %v126
    %v128 = vadd.f32 %v121, %v124
    %v129 = vadd.f32 %v128, %v127
    %v130 = vrcp.pop %v129
    %v131 = vmul.f32 %v129, %v130
    %v132 = vsub.f32 1.0, %v131
    %v133 = vmul.f32 %v130, %v132
    %v134 = vadd.f32 %v130, %v133
    %vm135 = vweird.f32 %v129
    %vm136 = vweird.f32 %v130
    %vm137 = vmor %vm135, %vm136
    %v138 = vsel %vm137, %v130, %v134
    %v139 = vand.u32 2147483647, %v129
    %vm140 = vcmp.eq.f32.partialorder %v139, 8.507059e+37
    %v141 = vand.u32 %v129, 2147483648
    %v142 = vor.u32 1.1754944e-38, %v141
    %v143 = vsel %vm140, %v142, %v138
    %v144 = vmul.f32 1.0, %v143
    %v145 = vmul.f32 %v121, %v144
    %146 = vst [vmem:[#allocation9] sm:$0xff] %v145
    %v147 = vmul.f32 %v124, %v144
    %s148 = scalar_lea.vmem [#allocation9], 8
    %149 = vst [vmem:[%s148] sm:$0xff] %v147
    %v150 = vmul.f32 %v127, %v144
    %s151 = scalar_lea.vmem [#allocation9], 16
    %152 = vst [vmem:[%s151] sm:$0xff] %v150
    // Predicated region
    $region26: #{tpu_custom_call.1} parent=1 // pred_check
      _
    $region27: #{tpu_custom_call.1} parent=1 // pred_check_branch
      %154 = sbr.rel (0) target = $region29
    $region28: #{tpu_custom_call.1} parent=1 // pred_region
      %156 = vsyncadd [#allocation4], 0
      %s157 = sshll.u32 [#allocation9], 4
      %s158 = int_to_ptr.vmem [resolvable:$true] %s157
      %s159 = sshll.u32 %s3, 4
      %s160 = int_to_ptr.hbm [resolvable:$true] %s159
      %165 = dma.vmem_to_hbm [thread:$0]  %s158, 384, %s160, [#allocation4], 128, 128, 8
    $region29: #{tpu_custom_call.1} parent=1 // pred_fallthru
      _
    // Predicated region
    $region30: #{tpu_custom_call.1} parent=1 // pred_check
      _
    $region31: #{tpu_custom_call.1} parent=1 // pred_check_branch
      %167 = sbr.rel (0) target = $region33
    $region32: #{tpu_custom_call.1} parent=1 // pred_region
      %169 = dma.done [#allocation4], 384
    $region33: #{tpu_custom_call.1} parent=1 // pred_fallthru
      _
    %170 = vsyncpa [#allocation3], 1
    %171 = vsyncpa [#allocation4], 1
    %172 = vsyncpa [#allocation5], 1
    %173 = vsyncpa [#allocation7], 1

</llo_original>
